<compile_context>
chip_gen: v6e
topology: v6e:2x2x1
jax: 0.10.0
libtpu: 0.0.40
codegen_flags: <defaults>
</compile_context>

<pallas_src>
import jax
import jax.numpy as jnp
from jax.experimental import pallas as pl
from jax.experimental.pallas import tpu as pltpu

D_IN = 28 * 28   # 784
D_H1 = 128
D_H2 = 64
D_H2P = 128      # hidden dim 64 zero-padded to a full 128-lane vreg
LANE = 128


def _round_up(n, m):
    return ((n + m - 1) // m) * m


def _cdiv(a, b):
    return -(-a // b)


def _device_kind():
    try:
        return jax.devices()[0].device_kind.lower()
    except Exception:
        return ""


def _mymodel_kernel(x_ref, w1_ref, b1_ref, w2_ref, b2_ref, w3n_ref, o_ref):
    # x_ref:   (TB, 784)          streamed (bf16 or f32)
    # w1_ref:  (784, 128)         resident
    # b1_ref:  (1, 128)  f32
    # w2_ref:  (128, 128)         resident, cols 64..127 are zero
    # b2_ref:  (1, 128)  f32      entries 64..127 are zero
    # w3n_ref: (128, Lp)          row-normalized W3^T, rows 64.. and cols L.. zero
    # o_ref:   (TB, Lp)
    x = x_ref[...]

    # fc1 + relu (f32 accumulation on the MXU)
    h1 = jnp.dot(x, w1_ref[...], preferred_element_type=jnp.float32) + b1_ref[...]
    h1 = jnp.maximum(h1, 0.0)

    # fc2 + relu (lane-dense 128-wide; padded lanes stay exactly 0)
    h2 = jnp.dot(h1.astype(w2_ref.dtype), w2_ref[...],
                 preferred_element_type=jnp.float32) + b2_ref[...]
    h2 = jnp.maximum(h2, 0.0)

    # F.normalize(h2) folded into an output row-scale:
    #   1 / max(||h2||, 1e-12) == rsqrt(max(sum(h2^2), 1e-24))
    sumsq = jnp.sum(h2 * h2, axis=-1, keepdims=True)
    inv_norm = jax.lax.rsqrt(jnp.maximum(sumsq, 1e-24))

    # fc3 (weight pre-normalized in the wrapper), then apply the row scale.
    out = jnp.dot(h2.astype(w3n_ref.dtype), w3n_ref[...],
                  preferred_element_type=jnp.float32)
    o_ref[...] = (out * inv_norm).astype(o_ref.dtype)


def mymodel_forward(x, w1, b1, w2, b2, w3, *, tile_b=None,
                    mxu_dtype=jnp.bfloat16, out_dtype=jnp.float32):
    """x: [B, 1, 28, 28] or [B, 784]; weights in PyTorch convention:
    w1 [128, 784], b1 [128], w2 [64, 128], b2 [64], w3 [num_labels, 64].

    mxu_dtype=jnp.bfloat16 (default) streams x in bf16 with f32 accumulation
    (tolerance ~1e-2). Use mxu_dtype=jnp.float32 for bit-tight results."""
    x2d = x.reshape(-1, D_IN).astype(jnp.float32)          # x.view(-1, 784)
    B = x2d.shape[0]
    L = w3.shape[0]
    Lp = max(LANE, _round_up(L, LANE))                      # lane-dense output

    kind = _device_kind()
    is_v7 = "7" in kind
    use_bf16_x = jnp.dtype(mxu_dtype) == jnp.dtype(jnp.bfloat16)

    # --- batch: pad only to a sublane multiple (<= 7 extra rows, no full-tile pad);
    #     a partial last grid block is handled (masked) by Pallas. -----------------
    B8 = _round_up(B, 8)
    if B8 != B:
        x2d = jnp.pad(x2d, ((0, B8 - B), (0, 0)))

    # --- per-chip batch tile ------------------------------------------------------
    auto_tile = tile_b is None
    if auto_tile:
        if "v5" in kind:
            tile_b = 1024
        else:                       # v6e / v7x / unknown
            tile_b = 2048 if use_bf16_x else 1024
    tile_b = max(8, min(_round_up(tile_b, 8), B8))
    if is_v7 and auto_tile and B8 > 8:
        # v7x has two TensorCores: aim for an even number of grid steps.
        steps = _cdiv(B8, tile_b)
        if steps % 2 != 0:
            tile_b = max(8, _round_up(_cdiv(B8, steps + 1), 8))
    grid = (_cdiv(B8, tile_b),)

    # --- grid-invariant weight prep hoisted out of the kernel ----------------------
    f32 = jnp.float32
    w1t = jnp.asarray(w1, f32).T.astype(mxu_dtype)                       # (784, 128)
    b1r = jnp.asarray(b1, f32).reshape(1, D_H1)                          # (1, 128)
    w2t = jnp.asarray(w2, f32).T                                         # (128, 64)
    w2tp = jnp.pad(w2t, ((0, 0), (0, D_H2P - D_H2))).astype(mxu_dtype)   # (128, 128)
    b2r = jnp.pad(jnp.asarray(b2, f32).reshape(1, D_H2),
                  ((0, 0), (0, D_H2P - D_H2)))                           # (1, 128)
    w3f = jnp.asarray(w3, f32)
    w3n = w3f / jnp.linalg.norm(w3f, axis=1, keepdims=True)              # no eps, as in module
    w3nt = jnp.pad(w3n.T, ((0, D_H2P - D_H2), (0, Lp - L))).astype(mxu_dtype)  # (128, Lp)

    x_in = x2d.astype(mxu_dtype)   # bf16 stream by default (the only HBM-streamed operand)

    # --- cost estimate & VMEM budget -----------------------------------------------
    it_x = jnp.dtype(mxu_dtype).itemsize
    it_o = jnp.dtype(out_dtype).itemsize
    w_elems = D_IN * D_H1 + D_H1 * D_H2P + D_H2P * Lp
    flops = 2 * B8 * (D_IN * D_H1 + D_H1 * D_H2P + D_H2P * Lp) + 4 * B8 * D_H2P
    bytes_accessed = (B8 * D_IN * it_x + B8 * Lp * it_o
                      + w_elems * it_x + (D_H1 + D_H2P) * 4)
    cost = pl.CostEstimate(flops=int(flops), transcendentals=int(B8),
                           bytes_accessed=int(bytes_accessed))
    vmem_need = (2 * tile_b * (D_IN * it_x + Lp * it_o)          # double-buffered x / out
                 + 2 * w_elems * it_x + 2 * (D_H1 + D_H2P) * 4)  # resident weights (x2 buffers)
    vmem_limit = int(min(max(32 << 20, int(vmem_need * 1.5)), 48 << 20))

    out = pl.pallas_call(
        _mymodel_kernel,
        out_shape=jax.ShapeDtypeStruct((B8, Lp), out_dtype),
        grid_spec=pltpu.PrefetchScalarGridSpec(
            num_scalar_prefetch=0,
            grid=grid,
            in_specs=[
                pl.BlockSpec((tile_b, D_IN), lambda i: (i, 0)),   # x tile (streamed)
                pl.BlockSpec((D_IN, D_H1),   lambda i: (0, 0)),   # W1^T (resident)
                pl.BlockSpec((1, D_H1),      lambda i: (0, 0)),   # b1
                pl.BlockSpec((D_H1, D_H2P),  lambda i: (0, 0)),   # W2^T (64->128 zero-padded)
                pl.BlockSpec((1, D_H2P),     lambda i: (0, 0)),   # b2 (zero-padded)
                pl.BlockSpec((D_H2P, Lp),    lambda i: (0, 0)),   # W3n^T (pre-normalized, padded)
            ],
            out_specs=pl.BlockSpec((tile_b, Lp), lambda i: (i, 0)),
        ),
        compiler_params=pltpu.CompilerParams(
            dimension_semantics=("parallel",),
            vmem_limit_bytes=vmem_limit,
        ),
        cost_estimate=cost,
    )(x_in, w1t, b1r, w2tp, b2r, w3nt)

    return out[:B, :L]


def _reference_forward(x, w1, b1, w2, b2, w3):
    """Plain-JAX reference mirroring the PyTorch module."""
    x2d = x.reshape(-1, D_IN).astype(jnp.float32)
    h1 = jnp.maximum(x2d @ w1.T + b1, 0.0)
    h2 = jnp.maximum(h1 @ w2.T + b2, 0.0)
    h2n = h2 / jnp.maximum(jnp.linalg.norm(h2, axis=1, keepdims=True), 1e-12)
    w3n = w3 / jnp.linalg.norm(w3, axis=1, keepdims=True)
    return h2n @ w3n.T


if __name__ == "__main__":
    key = jax.random.PRNGKey(0)
    k_x, k_w1, k_b1, k_w2, k_b2, k_w3 = jax.random.split(key, 6)

    B = 8            # small batch
    num_labels = 10  # MNIST labels

    # Deterministic synthetic parameters (PyTorch shapes: weight [out, in]).
    x = jax.random.normal(k_x, (B, 1, 28, 28), dtype=jnp.float32)
    w1 = jax.random.normal(k_w1, (D_H1, D_IN), dtype=jnp.float32) * 0.03
    b1 = jax.random.normal(k_b1, (D_H1,), dtype=jnp.float32) * 0.01
    w2 = jax.random.normal(k_w2, (D_H2, D_H1), dtype=jnp.float32) * 0.08
    b2 = jax.random.normal(k_b2, (D_H2,), dtype=jnp.float32) * 0.01
    w3 = jax.random.normal(k_w3, (num_labels, D_H2), dtype=jnp.float32) * 0.1

    ref = _reference_forward(x, w1, b1, w2, b2, w3)

    # 1) Exact-semantics path (f32 MXU inputs): tight tolerance.
    out_f32 = jax.block_until_ready(
        mymodel_forward(x, w1, b1, w2, b2, w3, mxu_dtype=jnp.float32))
    assert out_f32.shape == (B, num_labels), out_f32.shape
    assert jnp.allclose(out_f32, ref, atol=1e-5, rtol=1e-5), (
        f"f32 path max abs err {jnp.max(jnp.abs(out_f32 - ref))}")

    # 2) Default fast path (bf16-streamed x, f32 accumulation): loosened tolerance.
    out_bf = jax.block_until_ready(mymodel_forward(x, w1, b1, w2, b2, w3))
    assert out_bf.shape == (B, num_labels), out_bf.shape
    assert jnp.allclose(out_bf, ref, atol=3e-2, rtol=3e-2), (
        f"bf16 path max abs err {jnp.max(jnp.abs(out_bf - ref))}")

    # 3) Non-dividing batch/tile: partial last grid block, no host-side tile pad of x.
    B2 = 40
    x2 = jax.random.normal(k_x, (B2, 1, 28, 28), dtype=jnp.float32)
    ref2 = _reference_forward(x2, w1, b1, w2, b2, w3)
    out2 = jax.block_until_ready(
        mymodel_forward(x2, w1, b1, w2, b2, w3, tile_b=16, mxu_dtype=jnp.float32))
    assert out2.shape == (B2, num_labels), out2.shape
    assert jnp.allclose(out2, ref2, atol=1e-5, rtol=1e-5), (
        f"partial-block path max abs err {jnp.max(jnp.abs(out2 - ref2))}")

    print("KERNEL_OK")
</pallas_src>

<mosaic_0001>
module attributes {stable_mosaic.version = 11 : i64} {
  func.func @_mymodel_kernel(%arg0: i32, %arg1: memref<8x784xf32, #tpu.memory_space<vmem>>, %arg2: memref<784x128xf32, #tpu.memory_space<vmem>>, %arg3: memref<1x128xf32, #tpu.memory_space<vmem>>, %arg4: memref<128x128xf32, #tpu.memory_space<vmem>>, %arg5: memref<1x128xf32, #tpu.memory_space<vmem>>, %arg6: memref<128x128xf32, #tpu.memory_space<vmem>>, %arg7: memref<8x128xf32, #tpu.memory_space<vmem>>) attributes {dimension_semantics = [#tpu.dimension_semantics<parallel>], iteration_bounds = array<i64: 1>, scalar_prefetch = 0 : i64, scratch_operands = 0 : i64, tpu.core_type = #tpu.core_type<tc>, window_params = [{transform_indices = @transform_0, window_bounds = array<i64: 8, 784>}, {pipeline_mode = #tpu.pipeline_mode<synchronous>, transform_indices = @transform_1, window_bounds = array<i64: 784, 128>}, {pipeline_mode = #tpu.pipeline_mode<synchronous>, transform_indices = @transform_2, window_bounds = array<i64: 1, 128>}, {pipeline_mode = #tpu.pipeline_mode<synchronous>, transform_indices = @transform_3, window_bounds = array<i64: 128, 128>}, {pipeline_mode = #tpu.pipeline_mode<synchronous>, transform_indices = @transform_4, window_bounds = array<i64: 1, 128>}, {pipeline_mode = #tpu.pipeline_mode<synchronous>, transform_indices = @transform_5, window_bounds = array<i64: 128, 128>}, {transform_indices = @transform_6, window_bounds = array<i64: 8, 128>}]} {
    %c0 = arith.constant 0 : index
    %c0_0 = arith.constant 0 : index
    %0 = vector.load %arg1[%c0, %c0_0] : memref<8x784xf32, #tpu.memory_space<vmem>>, vector<8x784xf32>
    %c0_1 = arith.constant 0 : index
    %c0_2 = arith.constant 0 : index
    %1 = vector.load %arg2[%c0_1, %c0_2] : memref<784x128xf32, #tpu.memory_space<vmem>>, vector<784x128xf32>
    %cst = arith.constant dense<0.000000e+00> : vector<8x128xf32>
    %2 = tpu.matmul %0, %1, %cst {dimension_numbers = #tpu.dot_dimension_numbers<[1], [0], [0], [1], [0, 0, 1, 1], [], []>} : vector<8x784xf32>, vector<784x128xf32>, vector<8x128xf32> -> vector<8x128xf32>
    %c0_3 = arith.constant 0 : index
    %c0_4 = arith.constant 0 : index
    %3 = vector.load %arg3[%c0_3, %c0_4] : memref<1x128xf32, #tpu.memory_space<vmem>>, vector<1x128xf32>
    %4 = vector.broadcast %3 : vector<1x128xf32> to vector<8x128xf32>
    %5 = arith.addf %2, %4 : vector<8x128xf32>
    %cst_5 = arith.constant 0.000000e+00 : f32
    %6 = vector.broadcast %cst_5 : f32 to vector<8x128xf32>
    %7 = arith.maximumf %5, %6 : vector<8x128xf32>
    %c0_6 = arith.constant 0 : index
    %c0_7 = arith.constant 0 : index
    %8 = vector.load %arg4[%c0_6, %c0_7] : memref<128x128xf32, #tpu.memory_space<vmem>>, vector<128x128xf32>
    %cst_8 = arith.constant dense<0.000000e+00> : vector<8x128xf32>
    %9 = tpu.matmul %7, %8, %cst_8 {dimension_numbers = #tpu.dot_dimension_numbers<[1], [0], [0], [1], [0, 0, 1, 1], [], []>} : vector<8x128xf32>, vector<128x128xf32>, vector<8x128xf32> -> vector<8x128xf32>
    %c0_9 = arith.constant 0 : index
    %c0_10 = arith.constant 0 : index
    %10 = vector.load %arg5[%c0_9, %c0_10] : memref<1x128xf32, #tpu.memory_space<vmem>>, vector<1x128xf32>
    %11 = vector.broadcast %10 : vector<1x128xf32> to vector<8x128xf32>
    %12 = arith.addf %9, %11 : vector<8x128xf32>
    %cst_11 = arith.constant 0.000000e+00 : f32
    %13 = vector.broadcast %cst_11 : f32 to vector<8x128xf32>
    %14 = arith.maximumf %12, %13 : vector<8x128xf32>
    %15 = arith.mulf %14, %14 : vector<8x128xf32>
    %cst_12 = arith.constant dense<0.000000e+00> : vector<8xf32>
    %16 = vector.multi_reduction <add>, %15, %cst_12 [1] : vector<8x128xf32> to vector<8xf32>
    %17 = vector.shape_cast %16 : vector<8xf32> to vector<8x1xf32>
    %cst_13 = arith.constant 1.000000e-24 : f32
    %18 = vector.broadcast %cst_13 : f32 to vector<8x1xf32>
    %19 = arith.maximumf %17, %18 : vector<8x1xf32>
    %20 = math.rsqrt %19 : vector<8x1xf32>
    %c0_14 = arith.constant 0 : index
    %c0_15 = arith.constant 0 : index
    %21 = vector.load %arg6[%c0_14, %c0_15] : memref<128x128xf32, #tpu.memory_space<vmem>>, vector<128x128xf32>
    %cst_16 = arith.constant dense<0.000000e+00> : vector<8x128xf32>
    %22 = tpu.matmul %14, %21, %cst_16 {dimension_numbers = #tpu.dot_dimension_numbers<[1], [0], [0], [1], [0, 0, 1, 1], [], []>} : vector<8x128xf32>, vector<128x128xf32>, vector<8x128xf32> -> vector<8x128xf32>
    %23 = vector.broadcast %20 : vector<8x1xf32> to vector<8x128xf32>
    %24 = arith.mulf %22, %23 : vector<8x128xf32>
    %c0_17 = arith.constant 0 : index
    %c0_18 = arith.constant 0 : index
    %25 = vector.load %arg7[%c0_17, %c0_18] : memref<8x128xf32, #tpu.memory_space<vmem>>, vector<8x128xf32>
    tpu.vector_store %arg7[%c0_17, %c0_18], %24 {strides = array<i32>} : memref<8x128xf32, #tpu.memory_space<vmem>>, vector<8x128xf32>,
    return
  }
  func.func @transform_0(%arg0: i32) -> (i32, i32) {
    %c0_i32 = arith.constant 0 : i32
    %c0_i32_0 = arith.constant 0 : i32
    return %arg0, %c0_i32 : i32, i32
  }
  func.func @transform_1(%arg0: i32) -> (i32, i32) {
    %c0_i32 = arith.constant 0 : i32
    %c0_i32_0 = arith.constant 0 : i32
    %c0_i32_1 = arith.constant 0 : i32
    return %c0_i32, %c0_i32_0 : i32, i32
  }
  func.func @transform_2(%arg0: i32) -> (i32, i32) {
    %c0_i32 = arith.constant 0 : i32
    %c0_i32_0 = arith.constant 0 : i32
    %c0_i32_1 = arith.constant 0 : i32
    return %c0_i32, %c0_i32_0 : i32, i32
  }
  func.func @transform_3(%arg0: i32) -> (i32, i32) {
    %c0_i32 = arith.constant 0 : i32
    %c0_i32_0 = arith.constant 0 : i32
    %c0_i32_1 = arith.constant 0 : i32
    return %c0_i32, %c0_i32_0 : i32, i32
  }
  func.func @transform_4(%arg0: i32) -> (i32, i32) {
    %c0_i32 = arith.constant 0 : i32
    %c0_i32_0 = arith.constant 0 : i32
    %c0_i32_1 = arith.constant 0 : i32
    return %c0_i32, %c0_i32_0 : i32, i32
  }
  func.func @transform_5(%arg0: i32) -> (i32, i32) {
    %c0_i32 = arith.constant 0 : i32
    %c0_i32_0 = arith.constant 0 : i32
    %c0_i32_1 = arith.constant 0 : i32
    return %c0_i32, %c0_i32_0 : i32, i32
  }
  func.func @transform_6(%arg0: i32) -> (i32, i32) {
    %c0_i32 = arith.constant 0 : i32
    %c0_i32_0 = arith.constant 0 : i32
    return %arg0, %c0_i32 : i32, i32
  }
}

</mosaic_0001>

<llo_original>
// kernel: tpu_custom_call.1
$region0: #{tpu_custom_call.1}
  #allocation0 [shape = 'u32[]', space=smem, size = 0x4, offset = 0x4, fixed_abs, tag = 'smem constant byte address 0x4 - core index']
  #allocation1 [shape = 'u32[144,128]{1,0:T(1,128)}', space=vmem, size = 0x12000, scoped, tag = 'internal scratch']
  %s0 = inlined_call_operand.hbm [shape: f32[8,784], index: 0, kind: input, shape index: {}]
  %s1 = inlined_call_operand.hbm [shape: f32[784,128], index: 1, kind: input, shape index: {}]
  %s2 = inlined_call_operand.vmem [shape: f32[1,128], index: 2, kind: input, shape index: {}]
  %s3 = inlined_call_operand.hbm [shape: f32[128,128], index: 3, kind: input, shape index: {}]
  %s4 = inlined_call_operand.vmem [shape: f32[1,128], index: 4, kind: input, shape index: {}]
  %s5 = inlined_call_operand.hbm [shape: f32[128,128], index: 5, kind: input, shape index: {}]
  %s6 = inlined_call_operand.hbm [shape: f32[8,128], index: 6, kind: output, shape index: {}]
  %s7 = sld [smem:[#allocation0]]
  $region50: #{tpu_custom_call.1} parent=0
    _
  %s9 = ssub.s32 1, %s7
  %s10 = scalar_select 0, %s9, %s7
  $region1: #{tpu_custom_call.1} parent=0
    #allocation2 [shape = 'u8[28672]{0}', space=vmem, size = 0x7000, scoped, tag = 'input window, operand 0, single buffered']
    #allocation3 [shape = 's32[1]{0}', space=sflag, size = 0x4, scoped, tag = 'scoped memory for tpu_custom_call.1']
    #allocation4 [shape = 's32[1]{0}', space=sflag, size = 0x4, scoped, tag = 'scoped memory for tpu_custom_call.1']
    #allocation5 [shape = 'u8[401408]{0}', space=vmem, size = 0x62000, scoped, tag = 'input window, operand 1, single buffered']
    #allocation6 [shape = 's32[1]{0}', space=sflag, size = 0x4, scoped, tag = 'scoped memory for tpu_custom_call.1']
    #allocation7 [shape = 'u8[65536]{0}', space=vmem, size = 0x10000, scoped, tag = 'input window, operand 3, single buffered']
    #allocation8 [shape = 'u8[65536]{0}', space=vmem, size = 0x10000, scoped, tag = 'input window, operand 5, single buffered']
    #allocation9 [shape = 's32[1]{0}', space=sflag, size = 0x4, scoped, tag = 'scoped memory for tpu_custom_call.1']
    #allocation10 [shape = 'u8[4096]{0}', space=vmem, size = 0x1000, scoped, tag = 'output window, operand 0, single buffered']
    %11 = vsyncpa [#allocation3], 0
    %12 = vsyncpa [#allocation6], 0
    %13 = vsyncpa [#allocation9], 0
    %14 = vsyncpa [#allocation4], 0
    // Predicated region
    $region2: #{tpu_custom_call.1} parent=1 // pred_check
      _
    $region3: #{tpu_custom_call.1} parent=1 // pred_check_branch
      %16 = sbr.rel (0) target = $region5
    $region4: #{tpu_custom_call.1} parent=1 // pred_region
      %s18 = ssub.s32 896, 896
      %19 = vsyncadd [#allocation3], %s18
      %s21 = sshll.u32 [#allocation2], 4
      %s22 = int_to_ptr.vmem [resolvable:$true] %s21
      %24 = dma.hbm_to_vmem [thread:$0]  %s0, 896, %s22, [#allocation3]
    $region5: #{tpu_custom_call.1} parent=1 // pred_fallthru
      _
    // Predicated region
    $region6: #{tpu_custom_call.1} parent=1 // pred_check
      _
    $region7: #{tpu_custom_call.1} parent=1 // pred_check_branch
      %26 = sbr.rel (0) target = $region9
    $region8: #{tpu_custom_call.1} parent=1 // pred_region
      %s28 = ssub.s32 12544, 12544
      %29 = vsyncadd [#allocation6], %s28
      %s30 = sshll.u32 [#allocation5], 4
      %s31 = int_to_ptr.vmem [resolvable:$true] %s30
      %36 = dma.hbm_to_vmem [thread:$0]  %s1, 12544, %s31, [#allocation6], 128, 128, 8
    $region9: #{tpu_custom_call.1} parent=1 // pred_fallthru
      _
    // Predicated region
    $region10: #{tpu_custom_call.1} parent=1 // pred_check
      _
    $region11: #{tpu_custom_call.1} parent=1 // pred_check_branch
      %38 = sbr.rel (0) target = $region13
    $region12: #{tpu_custom_call.1} parent=1 // pred_region
      _
    $region13: #{tpu_custom_call.1} parent=1 // pred_fallthru
      _
    // Predicated region
    $region14: #{tpu_custom_call.1} parent=1 // pred_check
      _
    $region15: #{tpu_custom_call.1} parent=1 // pred_check_branch
      %40 = sbr.rel (0) target = $region17
    $region16: #{tpu_custom_call.1} parent=1 // pred_region
      %s42 = ssub.s32 2048, 2048
      %43 = vsyncadd [#allocation6], %s42
      %s44 = sshll.u32 [#allocation7], 4
      %s45 = int_to_ptr.vmem [resolvable:$true] %s44
      %50 = dma.hbm_to_vmem [thread:$0]  %s3, 2048, %s45, [#allocation6], 128, 128, 8
    $region17: #{tpu_custom_call.1} parent=1 // pred_fallthru
      _
    // Predicated region
    $region18: #{tpu_custom_call.1} parent=1 // pred_check
      _
    $region19: #{tpu_custom_call.1} parent=1 // pred_check_branch
      %52 = sbr.rel (0) target = $region21
    $region20: #{tpu_custom_call.1} parent=1 // pred_region
      _
    $region21: #{tpu_custom_call.1} parent=1 // pred_fallthru
      _
    // Predicated region
    $region22: #{tpu_custom_call.1} parent=1 // pred_check
      _
    $region23: #{tpu_custom_call.1} parent=1 // pred_check_branch
      %54 = sbr.rel (0) target = $region25
    $region24: #{tpu_custom_call.1} parent=1 // pred_region
      %s56 = ssub.s32 2048, 2048
      %57 = vsyncadd [#allocation9], %s56
      %s58 = sshll.u32 [#allocation8], 4
      %s59 = int_to_ptr.vmem [resolvable:$true] %s58
      %64 = dma.hbm_to_vmem [thread:$0]  %s5, 2048, %s59, [#allocation9], 128, 128, 8
    $region25: #{tpu_custom_call.1} parent=1 // pred_fallthru
      _
    // Predicated region
    $region26: #{tpu_custom_call.1} parent=1 // pred_check
      _
    $region27: #{tpu_custom_call.1} parent=1 // pred_check_branch
      %66 = sbr.rel (0) target = $region29
    $region28: #{tpu_custom_call.1} parent=1 // pred_region
      %67 = dma.done [#allocation3], 896
    $region29: #{tpu_custom_call.1} parent=1 // pred_fallthru
      _
    // Predicated region
    $region30: #{tpu_custom_call.1} parent=1 // pred_check
      _
    $region31: #{tpu_custom_call.1} parent=1 // pred_check_branch
      %69 = sbr.rel (0) target = $region33
    $region32: #{tpu_custom_call.1} parent=1 // pred_region
      %70 = dma.done [#allocation6], 12544
    $region33: #{tpu_custom_call.1} parent=1 // pred_fallthru
      _
    // Predicated region
    $region34: #{tpu_custom_call.1} parent=1 // pred_check
      _
    $region35: #{tpu_custom_call.1} parent=1 // pred_check_branch
      %72 = sbr.rel (0) target = $region37
    $region36: #{tpu_custom_call.1} parent=1 // pred_region
      %73 = dma.done [#allocation6], 2048
    $region37: #{tpu_custom_call.1} parent=1 // pred_fallthru
      _
    // Predicated region
    $region38: #{tpu_custom_call.1} parent=1 // pred_check
      _
    $region39: #{tpu_custom_call.1} parent=1 // pred_check_branch
      %75 = sbr.rel (0) target = $region41
    $region40: #{tpu_custom_call.1} parent=1 // pred_region
      %76 = dma.done [#allocation9], 2048
    $region41: #{tpu_custom_call.1} parent=1 // pred_fallthru
      _
    %v77 = vld [vmem:[#allocation2] sm:$0xff]
    %v78 = vld [vmem:[#allocation2 + $0x8] sm:$0xff]
    %v79 = vld [vmem:[#allocation2 + $0x10] sm:$0xff]
    %v80 = vld [vmem:[#allocation2 + $0x18] sm:$0xff]
    %v81 = vld [vmem:[#allocation2 + $0x20] sm:$0xff]
    %v82 = vld [vmem:[#allocation2 + $0x28] sm:$0xff]
    %v83 = vld [vmem:[#allocation2 + $0x30] sm:$0xff]
    %v84 = vld [vmem:[#allocation5] sm:$0xff]
    %v85 = vld [vmem:[#allocation5 + $0x8] sm:$0xff]
    %v86 = vld [vmem:[#allocation5 + $0x10] sm:$0xff]
    %v87 = vld [vmem:[#allocation5 + $0x18] sm:$0xff]
    %v88 = vld [vmem:[#allocation5 + $0x20] sm:$0xff]
    %v89 = vld [vmem:[#allocation5 + $0x28] sm:$0xff]
    %v90 = vld [vmem:[#allocation5 + $0x30] sm:$0xff]
    %v91 = vld [vmem:[#allocation5 + $0x38] sm:$0xff]
    %v92 = vld [vmem:[#allocation5 + $0x40] sm:$0xff]
    %v93 = vld [vmem:[#allocation5 + $0x48] sm:$0xff]
    %v94 = vld [vmem:[#allocation5 + $0x50] sm:$0xff]
    %v95 = vld [vmem:[#allocation5 + $0x58] sm:$0xff]
    %v96 = vld [vmem:[#allocation5 + $0x60] sm:$0xff]
    %v97 = vld [vmem:[#allocation5 + $0x68] sm:$0xff]
    %v98 = vld [vmem:[#allocation5 + $0x70] sm:$0xff]
    %v99 = vld [vmem:[#allocation5 + $0x78] sm:$0xff]
    %v100 = vld [vmem:[#allocation5 + $0x80] sm:$0xff]
    %v101 = vld [vmem:[#allocation5 + $0x88] sm:$0xff]
    %v102 = vld [vmem:[#allocation5 + $0x90] sm:$0xff]
    %v103 = vld [vmem:[#allocation5 + $0x98] sm:$0xff]
    %v104 = vld [vmem:[#allocation5 + $0xa0] sm:$0xff]
    %v105 = vld [vmem:[#allocation5 + $0xa8] sm:$0xff]
    %v106 = vld [vmem:[#allocation5 + $0xb0] sm:$0xff]
    %v107 = vld [vmem:[#allocation5 + $0xb8] sm:$0xff]
    %v108 = vld [vmem:[#allocation5 + $0xc0] sm:$0xff]
    %v109 = vld [vmem:[#allocation5 + $0xc8] sm:$0xff]
    %v110 = vld [vmem:[#allocation5 + $0xd0] sm:$0xff]
    %v111 = vld [vmem:[#allocation5 + $0xd8] sm:$0xff]
    %v112 = vld [vmem:[#allocation5 + $0xe0] sm:$0xff]
    %v113 = vld [vmem:[#allocation5 + $0xe8] sm:$0xff]
    %v114 = vld [vmem:[#allocation5 + $0xf0] sm:$0xff]
    %v115 = vld [vmem:[#allocation5 + $0xf8] sm:$0xff]
    %v116 = vld [vmem:[#allocation5 + $0x100] sm:$0xff]
    %v117 = vld [vmem:[#allocation5 + $0x108] sm:$0xff]
    %v118 = vld [vmem:[#allocation5 + $0x110] sm:$0xff]
    %v119 = vld [vmem:[#allocation5 + $0x118] sm:$0xff]
    %v120 = vld [vmem:[#allocation5 + $0x120] sm:$0xff]
    %v121 = vld [vmem:[#allocation5 + $0x128] sm:$0xff]
    %v122 = vld [vmem:[#allocation5 + $0x130] sm:$0xff]
    %v123 = vld [vmem:[#allocation5 + $0x138] sm:$0xff]
    %v124 = vld [vmem:[#allocation5 + $0x140] sm:$0xff]
    %v125 = vld [vmem:[#allocation5 + $0x148] sm:$0xff]
    %v126 = vld [vmem:[#allocation5 + $0x150] sm:$0xff]
    %v127 = vld [vmem:[#allocation5 + $0x158] sm:$0xff]
    %v128 = vld [vmem:[#allocation5 + $0x160] sm:$0xff]
    %v129 = vld [vmem:[#allocation5 + $0x168] sm:$0xff]
    %v130 = vld [vmem:[#allocation5 + $0x170] sm:$0xff]
    %v131 = vld [vmem:[#allocation5 + $0x178] sm:$0xff]
    %v132 = vld [vmem:[#allocation5 + $0x180] sm:$0xff]
    %v133 = vld [vmem:[#allocation5 + $0x188] sm:$0xff]
    %v134 = vld [vmem:[#allocation5 + $0x190] sm:$0xff]
    %v135 = vld [vmem:[#allocation5 + $0x198] sm:$0xff]
    %v136 = vld [vmem:[#allocation5 + $0x1a0] sm:$0xff]
    %v137 = vld [vmem:[#allocation5 + $0x1a8] sm:$0xff]
    %v138 = vld [vmem:[#allocation5 + $0x1b0] sm:$0xff]
    %v139 = vld [vmem:[#allocation5 + $0x1b8] sm:$0xff]
    %v140 = vld [vmem:[#allocation5 + $0x1c0] sm:$0xff]
    %v141 = vld [vmem:[#allocation5 + $0x1c8] sm:$0xff]
    %v142 = vld [vmem:[#allocation5 + $0x1d0] sm:$0xff]
    %v143 = vld [vmem:[#allocation5 + $0x1d8] sm:$0xff]
    %v144 = vld [vmem:[#allocation5 + $0x1e0] sm:$0xff]
    %v145 = vld [vmem:[#allocation5 + $0x1e8] sm:$0xff]
    %v146 = vld [vmem:[#allocation5 + $0x1f0] sm:$0xff]
    %v147 = vld [vmem:[#allocation5 + $0x1f8] sm:$0xff]
    %v148 = vld [vmem:[#allocation5 + $0x200] sm:$0xff]
    %v149 = vld [vmem:[#allocation5 + $0x208] sm:$0xff]
    %v150 = vld [vmem:[#allocation5 + $0x210] sm:$0xff]
    %v151 = vld [vmem:[#allocation5 + $0x218] sm:$0xff]
    %v152 = vld [vmem:[#allocation5 + $0x220] sm:$0xff]
    %v153 = vld [vmem:[#allocation5 + $0x228] sm:$0xff]
    %v154 = vld [vmem:[#allocation5 + $0x230] sm:$0xff]
    %v155 = vld [vmem:[#allocation5 + $0x238] sm:$0xff]
    %v156 = vld [vmem:[#allocation5 + $0x240] sm:$0xff]
    %v157 = vld [vmem:[#allocation5 + $0x248] sm:$0xff]
    %v158 = vld [vmem:[#allocation5 + $0x250] sm:$0xff]
    %v159 = vld [vmem:[#allocation5 + $0x258] sm:$0xff]
    %v160 = vld [vmem:[#allocation5 + $0x260] sm:$0xff]
    %v161 = vld [vmem:[#allocation5 + $0x268] sm:$0xff]
    %v162 = vld [vmem:[#allocation5 + $0x270] sm:$0xff]
    %v163 = vld [vmem:[#allocation5 + $0x278] sm:$0xff]
    %v164 = vld [vmem:[#allocation5 + $0x280] sm:$0xff]
    %v165 = vld [vmem:[#allocation5 + $0x288] sm:$0xff]
    %v166 = vld [vmem:[#allocation5 + $0x290] sm:$0xff]
    %v167 = vld [vmem:[#allocation5 + $0x298] sm:$0xff]
    %v168 = vld [vmem:[#allocation5 + $0x2a0] sm:$0xff]
    %v169 = vld [vmem:[#allocation5 + $0x2a8] sm:$0xff]
    %v170 = vld [vmem:[#allocation5 + $0x2b0] sm:$0xff]
    %v171 = vld [vmem:[#allocation5 + $0x2b8] sm:$0xff]
    %v172 = vld [vmem:[#allocation5 + $0x2c0] sm:$0xff]
    %v173 = vld [vmem:[#allocation5 + $0x2c8] sm:$0xff]
    %v174 = vld [vmem:[#allocation5 + $0x2d0] sm:$0xff]
    %v175 = vld [vmem:[#allocation5 + $0x2d8] sm:$0xff]
    %v176 = vld [vmem:[#allocation5 + $0x2e0] sm:$0xff]
    %v177 = vld [vmem:[#allocation5 + $0x2e8] sm:$0xff]
    %v178 = vld [vmem:[#allocation5 + $0x2f0] sm:$0xff]
    %v179 = vld [vmem:[#allocation5 + $0x2f8] sm:$0xff]
    %v180 = vld [vmem:[#allocation5 + $0x300] sm:$0xff]
    %v181 = vld [vmem:[#allocation5 + $0x308] sm:$0xff]
    %v182 = vld [vmem:[%s2] sm:$0x1]
    %v184 = vlaneseq
    %v185 = vshrl.u32 %v184, 7
    %v186 = vsub.s32 0, %v185
    %v187 = vrot.slane %v182, %v186
    %vm189 = vcmask 130048
    %v191 = vsel %vm189, %v83, 0
    %193 = vmatprep.subr.mxu0 0.0
    %194 = vmatpush1.msra.mxu0 %v99
    %195 = vmatprep.subr.mxu0 0.0
    %196 = vmatpush1.msra.mxu0 %v98
    %197 = vmatprep.subr.mxu0 0.0
    %198 = vmatpush1.msra.mxu0 %v97
    %199 = vmatprep.subr.mxu0 0.0
    %200 = vmatpush1.msra.mxu0 %v96
    %201 = vmatprep.subr.mxu0 0.0
    %202 = vmatpush1.msra.mxu0 %v95
    %203 = vmatprep.subr.mxu0 0.0
    %204 = vmatpush1.msra.mxu0 %v94
    %205 = vmatprep.subr.mxu0 0.0
    %206 = vmatpush1.msra.mxu0 %v93
    %207 = vmatprep.subr.mxu0 0.0
    %208 = vmatpush1.msra.mxu0 %v92
    %209 = vmatprep.subr.mxu0 0.0
    %210 = vmatpush1.msra.mxu0 %v91
    %211 = vmatprep.subr.mxu0 0.0
    %212 = vmatpush1.msra.mxu0 %v90
    %213 = vmatprep.subr.mxu0 0.0
    %214 = vmatpush1.msra.mxu0 %v89
    %215 = vmatprep.subr.mxu0 0.0
    %216 = vmatpush1.msra.mxu0 %v88
    %217 = vmatprep.subr.mxu0 0.0
    %218 = vmatpush1.msra.mxu0 %v87
    %219 = vmatprep.subr.mxu0 0.0
    %220 = vmatpush1.msra.mxu0 %v86
    %221 = vmatprep.subr.mxu0 0.0
    %222 = vmatpush1.msra.mxu0 %v85
    %223 = vmatprep.subr.mxu0 0.0
    %224 = vmatpush1.msra.mxu0 %v84
    %225 = vmatprep.subr.mxu0 0.0
    %226 = vmatpush2.msra.mxu0 %v115
    %227 = vmatprep.subr.mxu0 0.0
    %228 = vmatpush2.msra.mxu0 %v114
    %229 = vmatprep.subr.mxu0 0.0
    %230 = vmatpush2.msra.mxu0 %v113
    %231 = vmatprep.subr.mxu0 0.0
    %232 = vmatpush2.msra.mxu0 %v112
    %233 = vmatprep.subr.mxu0 0.0
    %234 = vmatpush2.msra.mxu0 %v111
    %235 = vmatprep.subr.mxu0 0.0
    %236 = vmatpush2.msra.mxu0 %v110
    %237 = vmatprep.subr.mxu0 0.0
    %238 = vmatpush2.msra.mxu0 %v109
    %239 = vmatprep.subr.mxu0 0.0
    %240 = vmatpush2.msra.mxu0 %v108
    %241 = vmatprep.subr.mxu0 0.0
    %242 = vmatpush2.msra.mxu0 %v107
    %243 = vmatprep.subr.mxu0 0.0
    %244 = vmatpush2.msra.mxu0 %v106
    %245 = vmatprep.subr.mxu0 0.0
    %246 = vmatpush2.msra.mxu0 %v105
    %247 = vmatprep.subr.mxu0 0.0
    %248 = vmatpush2.msra.mxu0 %v104
    %249 = vmatprep.subr.mxu0 0.0
    %250 = vmatpush2.msra.mxu0 %v103
    %251 = vmatprep.subr.mxu0 0.0
    %252 = vmatpush2.msra.mxu0 %v102
    %253 = vmatprep.subr.mxu0 0.0
    %254 = vmatpush2.msra.mxu0 %v101
    %255 = vmatprep.subr.mxu0 0.0
    %256 = vmatpush2.msra.mxu0 %v100
    %257 = vmatprep.mubr.f32.mxu0 %v78
    %258 = vmatmul.mubr.f32.gmra.mxu0 %v77
    %v259 = vpop.f32.mrf.mxu0
    %v260 = vadd.f32 %v187, %v259
    %v261 = vpop.f32.mrf.mxu0
    %262 = vdwg.mxu0
    %263 = vmatprep.subr.mxu0 0.0
    %264 = vmatpush1.msra.mxu0 %v131
    %265 = vmatprep.subr.mxu0 0.0
    %266 = vmatpush1.msra.mxu0 %v130
    %267 = vmatprep.subr.mxu0 0.0
    %268 = vmatpush1.msra.mxu0 %v129
    %269 = vmatprep.subr.mxu0 0.0
    %270 = vmatpush1.msra.mxu0 %v128
    %271 = vmatprep.subr.mxu0 0.0
    %272 = vmatpush1.msra.mxu0 %v127
    %273 = vmatprep.subr.mxu0 0.0
    %274 = vmatpush1.msra.mxu0 %v126
    %275 = vmatprep.subr.mxu0 0.0
    %276 = vmatpush1.msra.mxu0 %v125
    %277 = vmatprep.subr.mxu0 0.0
    %278 = vmatpush1.msra.mxu0 %v124
    %279 = vmatprep.subr.mxu0 0.0
    %280 = vmatpush1.msra.mxu0 %v123
    %281 = vmatprep.subr.mxu0 0.0
    %282 = vmatpush1.msra.mxu0 %v122
    %283 = vmatprep.subr.mxu0 0.0
    %284 = vmatpush1.msra.mxu0 %v121
    %285 = vmatprep.subr.mxu0 0.0
    %286 = vmatpush1.msra.mxu0 %v120
    %287 = vmatprep.subr.mxu0 0.0
    %288 = vmatpush1.msra.mxu0 %v119
    %289 = vmatprep.subr.mxu0 0.0
    %290 = vmatpush1.msra.mxu0 %v118
    %291 = vmatprep.subr.mxu0 0.0
    %292 = vmatpush1.msra.mxu0 %v117
    %293 = vmatprep.subr.mxu0 0.0
    %294 = vmatpush1.msra.mxu0 %v116
    %295 = vmatprep.subr.mxu0 0.0
    %296 = vmatpush2.msra.mxu0 %v147
    %297 = vmatprep.subr.mxu0 0.0
    %298 = vmatpush2.msra.mxu0 %v146
    %299 = vmatprep.subr.mxu0 0.0
    %300 = vmatpush2.msra.mxu0 %v145
    %301 = vmatprep.subr.mxu0 0.0
    %302 = vmatpush2.msra.mxu0 %v144
    %303 = vmatprep.subr.mxu0 0.0
    %304 = vmatpush2.msra.mxu0 %v143
    %305 = vmatprep.subr.mxu0 0.0
    %306 = vmatpush2.msra.mxu0 %v142
    %307 = vmatprep.subr.mxu0 0.0
    %308 = vmatpush2.msra.mxu0 %v141
    %309 = vmatprep.subr.mxu0 0.0
    %310 = vmatpush2.msra.mxu0 %v140
    %311 = vmatprep.subr.mxu0 0.0
    %312 = vmatpush2.msra.mxu0 %v139
    %313 = vmatprep.subr.mxu0 0.0
    %314 = vmatpush2.msra.mxu0 %v138
    %315 = vmatprep.subr.mxu0 0.0
    %316 = vmatpush2.msra.mxu0 %v137
    %317 = vmatprep.subr.mxu0 0.0
    %318 = vmatpush2.msra.mxu0 %v136
    %319 = vmatprep.subr.mxu0 0.0
    %320 = vmatpush2.msra.mxu0 %v135
    %321 = vmatprep.subr.mxu0 0.0
    %322 = vmatpush2.msra.mxu0 %v134
    %323 = vmatprep.subr.mxu0 0.0
    %324 = vmatpush2.msra.mxu0 %v133
    %325 = vmatprep.subr.mxu0 0.0
    %326 = vmatpush2.msra.mxu0 %v132
    %327 = vmatprep.mubr.f32.mxu0 %v80
    %328 = vmatmul.mubr.f32.gmra.mxu0 %v79
    %v329 = vpop.f32.mrf.mxu0
    %v330 = vadd.f32 %v260, %v329
    %v331 = vpop.f32.mrf.mxu0
    %332 = vdwg.mxu0
    %333 = vmatprep.subr.mxu0 0.0
    %334 = vmatpush1.msra.mxu0 %v163
    %335 = vmatprep.subr.mxu0 0.0
    %336 = vmatpush1.msra.mxu0 %v162
    %337 = vmatprep.subr.mxu0 0.0
    %338 = vmatpush1.msra.mxu0 %v161
    %339 = vmatprep.subr.mxu0 0.0
    %340 = vmatpush1.msra.mxu0 %v160
    %341 = vmatprep.subr.mxu0 0.0
    %342 = vmatpush1.msra.mxu0 %v159
    %343 = vmatprep.subr.mxu0 0.0
    %344 = vmatpush1.msra.mxu0 %v158
    %345 = vmatprep.subr.mxu0 0.0
    %346 = vmatpush1.msra.mxu0 %v157
    %347 = vmatprep.subr.mxu0 0.0
    %348 = vmatpush1.msra.mxu0 %v156
    %349 = vmatprep.subr.mxu0 0.0
    %350 = vmatpush1.msra.mxu0 %v155
    %351 = vmatprep.subr.mxu0 0.0
    %352 = vmatpush1.msra.mxu0 %v154
    %353 = vmatprep.subr.mxu0 0.0
    %354 = vmatpush1.msra.mxu0 %v153
    %355 = vmatprep.subr.mxu0 0.0
    %356 = vmatpush1.msra.mxu0 %v152
    %357 = vmatprep.subr.mxu0 0.0
    %358 = vmatpush1.msra.mxu0 %v151
    %359 = vmatprep.subr.mxu0 0.0
    %360 = vmatpush1.msra.mxu0 %v150
    %361 = vmatprep.subr.mxu0 0.0
    %362 = vmatpush1.msra.mxu0 %v149
    %363 = vmatprep.subr.mxu0 0.0
    %364 = vmatpush1.msra.mxu0 %v148
    %365 = vmatprep.subr.mxu0 0.0
    %366 = vmatpush2.msra.mxu0 %v179
    %367 = vmatprep.subr.mxu0 0.0
    %368 = vmatpush2.msra.mxu0 %v178
    %369 = vmatprep.subr.mxu0 0.0
    %370 = vmatpush2.msra.mxu0 %v177
    %371 = vmatprep.subr.mxu0 0.0
    %372 = vmatpush2.msra.mxu0 %v176
    %373 = vmatprep.subr.mxu0 0.0
    %374 = vmatpush2.msra.mxu0 %v175
    %375 = vmatprep.subr.mxu0 0.0
    %376 = vmatpush2.msra.mxu0 %v174
    %377 = vmatprep.subr.mxu0 0.0
    %378 = vmatpush2.msra.mxu0 %v173
    %379 = vmatprep.subr.mxu0 0.0
    %380 = vmatpush2.msra.mxu0 %v172
    %381 = vmatprep.subr.mxu0 0.0
    %382 = vmatpush2.msra.mxu0 %v171
    %383 = vmatprep.subr.mxu0 0.0
    %384 = vmatpush2.msra.mxu0 %v170
    %385 = vmatprep.subr.mxu0 0.0
    %386 = vmatpush2.msra.mxu0 %v169
    %387 = vmatprep.subr.mxu0 0.0
    %388 = vmatpush2.msra.mxu0 %v168
    %389 = vmatprep.subr.mxu0 0.0
    %390 = vmatpush2.msra.mxu0 %v167
    %391 = vmatprep.subr.mxu0 0.0
    %392 = vmatpush2.msra.mxu0 %v166
    %393 = vmatprep.subr.mxu0 0.0
    %394 = vmatpush2.msra.mxu0 %v165
    %395 = vmatprep.subr.mxu0 0.0
    %396 = vmatpush2.msra.mxu0 %v164
    %397 = vmatprep.mubr.f32.mxu0 %v82
    %398 = vmatmul.mubr.f32.gmra.mxu0 %v81
    %v399 = vpop.f32.mrf.mxu0
    %v400 = vadd.f32 %v330, %v399
    %v401 = vpop.f32.mrf.mxu0
    %402 = vdwg.mxu0
    %403 = vmatprep.subr.mxu0 0.0
    %404 = vmatpush1.msra.mxu0 0.0
    %405 = vmatprep.subr.mxu0 0.0
    %406 = vmatpush1.msra.mxu0 0.0
    %407 = vmatprep.subr.mxu0 0.0
    %408 = vmatpush1.msra.mxu0 0.0
    %409 = vmatprep.subr.mxu0 0.0
    %410 = vmatpush1.msra.mxu0 0.0
    %411 = vmatprep.subr.mxu0 0.0
    %412 = vmatpush1.msra.mxu0 0.0
    %413 = vmatprep.subr.mxu0 0.0
    %414 = vmatpush1.msra.mxu0 0.0
    %415 = vmatprep.subr.mxu0 0.0
    %416 = vmatpush1.msra.mxu0 0.0
    %417 = vmatprep.subr.mxu0 0.0
    %418 = vmatpush1.msra.mxu0 0.0
    %419 = vmatprep.subr.mxu0 0.0
    %420 = vmatpush1.msra.mxu0 0.0
    %421 = vmatprep.subr.mxu0 0.0
    %422 = vmatpush1.msra.mxu0 0.0
    %423 = vmatprep.subr.mxu0 0.0
    %424 = vmatpush1.msra.mxu0 0.0
    %425 = vmatprep.subr.mxu0 0.0
    %426 = vmatpush1.msra.mxu0 0.0
    %427 = vmatprep.subr.mxu0 0.0
    %428 = vmatpush1.msra.mxu0 0.0
    %429 = vmatprep.subr.mxu0 0.0
    %430 = vmatpush1.msra.mxu0 0.0
    %431 = vmatprep.subr.mxu0 0.0
    %432 = vmatpush1.msra.mxu0 %v181
    %433 = vmatprep.subr.mxu0 0.0
    %434 = vmatpush1.msra.mxu0 %v180
    %435 = vmatprep.subr.mxu0 0.0
    %436 = vmatpush2.msra.mxu0 0.0
    %437 = vmatprep.subr.mxu0 0.0
    %438 = vmatpush2.msra.mxu0 0.0
    %439 = vmatprep.subr.mxu0 0.0
    %440 = vmatpush2.msra.mxu0 0.0
    %441 = vmatprep.subr.mxu0 0.0
    %442 = vmatpush2.msra.mxu0 0.0
    %443 = vmatprep.subr.mxu0 0.0
    %444 = vmatpush2.msra.mxu0 0.0
    %445 = vmatprep.subr.mxu0 0.0
    %446 = vmatpush2.msra.mxu0 0.0
    %447 = vmatprep.subr.mxu0 0.0
    %448 = vmatpush2.msra.mxu0 0.0
    %449 = vmatprep.subr.mxu0 0.0
    %450 = vmatpush2.msra.mxu0 0.0
    %451 = vmatprep.subr.mxu0 0.0
    %452 = vmatpush2.msra.mxu0 0.0
    %453 = vmatprep.subr.mxu0 0.0
    %454 = vmatpush2.msra.mxu0 0.0
    %455 = vmatprep.subr.mxu0 0.0
    %456 = vmatpush2.msra.mxu0 0.0
    %457 = vmatprep.subr.mxu0 0.0
    %458 = vmatpush2.msra.mxu0 0.0
    %459 = vmatprep.subr.mxu0 0.0
    %460 = vmatpush2.msra.mxu0 0.0
    %461 = vmatprep.subr.mxu0 0.0
    %462 = vmatpush2.msra.mxu0 0.0
    %463 = vmatprep.subr.mxu0 0.0
    %464 = vmatpush2.msra.mxu0 0.0
    %465 = vmatprep.subr.mxu0 0.0
    %466 = vmatpush2.msra.mxu0 0.0
    %467 = vmatprep.mubr.f32.mxu0 0.0
    %468 = vmatmul.mubr.f32.gmra.mxu0 %v191
    %v469 = vpop.f32.mrf.mxu0
    %v470 = vadd.f32 %v400, %v469
    %v471 = vpop.f32.mrf.mxu0
    %472 = vdwg.mxu0
    %v473 = vmax.f32 %v470, 0.0
    %v474 = vld [vmem:[#allocation7] sm:$0xff]
    %v475 = vld [vmem:[#allocation7 + $0x8] sm:$0xff]
    %v476 = vld [vmem:[#allocation7 + $0x10] sm:$0xff]
    %v477 = vld [vmem:[#allocation7 + $0x18] sm:$0xff]
    %v478 = vld [vmem:[#allocation7 + $0x20] sm:$0xff]
    %v479 = vld [vmem:[#allocation7 + $0x28] sm:$0xff]
    %v480 = vld [vmem:[#allocation7 + $0x30] sm:$0xff]
    %v481 = vld [vmem:[#allocation7 + $0x38] sm:$0xff]
    %v482 = vld [vmem:[#allocation7 + $0x40] sm:$0xff]
    %v483 = vld [vmem:[#allocation7 + $0x48] sm:$0xff]
    %v484 = vld [vmem:[#allocation7 + $0x50] sm:$0xff]
    %v485 = vld [vmem:[#allocation7 + $0x58] sm:$0xff]
    %v486 = vld [vmem:[#allocation7 + $0x60] sm:$0xff]
    %v487 = vld [vmem:[#allocation7 + $0x68] sm:$0xff]
    %v488 = vld [vmem:[#allocation7 + $0x70] sm:$0xff]
    %v489 = vld [vmem:[#allocation7 + $0x78] sm:$0xff]
    %v490 = vld [vmem:[%s4] sm:$0x1]
    %v492 = vlaneseq
    %v493 = vshrl.u32 %v492, 7
    %v494 = vsub.s32 0, %v493
    %v495 = vrot.slane %v490, %v494
    %497 = vmatprep.subr.mxu0 0.0
    %498 = vmatpush1.msra.mxu0 %v489
    %499 = vmatprep.subr.mxu0 0.0
    %500 = vmatpush1.msra.mxu0 %v488
    %501 = vmatprep.subr.mxu0 0.0
    %502 = vmatpush1.msra.mxu0 %v487
    %503 = vmatprep.subr.mxu0 0.0
    %504 = vmatpush1.msra.mxu0 %v486
    %505 = vmatprep.subr.mxu0 0.0
    %506 = vmatpush1.msra.mxu0 %v485
    %507 = vmatprep.subr.mxu0 0.0
    %508 = vmatpush1.msra.mxu0 %v484
    %509 = vmatprep.subr.mxu0 0.0
    %510 = vmatpush1.msra.mxu0 %v483
    %511 = vmatprep.subr.mxu0 0.0
    %512 = vmatpush1.msra.mxu0 %v482
    %513 = vmatprep.subr.mxu0 0.0
    %514 = vmatpush1.msra.mxu0 %v481
    %515 = vmatprep.subr.mxu0 0.0
    %516 = vmatpush1.msra.mxu0 %v480
    %517 = vmatprep.subr.mxu0 0.0
    %518 = vmatpush1.msra.mxu0 %v479
    %519 = vmatprep.subr.mxu0 0.0
    %520 = vmatpush1.msra.mxu0 %v478
    %521 = vmatprep.subr.mxu0 0.0
    %522 = vmatpush1.msra.mxu0 %v477
    %523 = vmatprep.subr.mxu0 0.0
    %524 = vmatpush1.msra.mxu0 %v476
    %525 = vmatprep.subr.mxu0 0.0
    %526 = vmatpush1.msra.mxu0 %v475
    %527 = vmatprep.subr.mxu0 0.0
    %528 = vmatpush1.msra.mxu0 %v474
    %529 = vmatprep.subr.mxu0 0.0
    %530 = vmatpush2.msra.mxu0 0.0
    %531 = vmatprep.subr.mxu0 0.0
    %532 = vmatpush2.msra.mxu0 0.0
    %533 = vmatprep.subr.mxu0 0.0
    %534 = vmatpush2.msra.mxu0 0.0
    %535 = vmatprep.subr.mxu0 0.0
    %536 = vmatpush2.msra.mxu0 0.0
    %537 = vmatprep.subr.mxu0 0.0
    %538 = vmatpush2.msra.mxu0 0.0
    %539 = vmatprep.subr.mxu0 0.0
    %540 = vmatpush2.msra.mxu0 0.0
    %541 = vmatprep.subr.mxu0 0.0
    %542 = vmatpush2.msra.mxu0 0.0
    %543 = vmatprep.subr.mxu0 0.0
    %544 = vmatpush2.msra.mxu0 0.0
    %545 = vmatprep.subr.mxu0 0.0
    %546 = vmatpush2.msra.mxu0 0.0
    %547 = vmatprep.subr.mxu0 0.0
    %548 = vmatpush2.msra.mxu0 0.0
    %549 = vmatprep.subr.mxu0 0.0
    %550 = vmatpush2.msra.mxu0 0.0
    %551 = vmatprep.subr.mxu0 0.0
    %552 = vmatpush2.msra.mxu0 0.0
    %553 = vmatprep.subr.mxu0 0.0
    %554 = vmatpush2.msra.mxu0 0.0
    %555 = vmatprep.subr.mxu0 0.0
    %556 = vmatpush2.msra.mxu0 0.0
    %557 = vmatprep.subr.mxu0 0.0
    %558 = vmatpush2.msra.mxu0 0.0
    %559 = vmatprep.subr.mxu0 0.0
    %560 = vmatpush2.msra.mxu0 0.0
    %561 = vmatprep.mubr.f32.mxu0 0.0
    %562 = vmatmul.mubr.f32.gmra.mxu0 %v473
    %v563 = vpop.f32.mrf.mxu0
    %v564 = vadd.f32 %v495, %v563
    %v565 = vpop.f32.mrf.mxu0
    %566 = vdwg.mxu0
    %v567 = vmax.f32 %v564, 0.0
    %v568 = vmul.f32 %v567, %v567
    %569 = vadd.xlane.f32.xlu0 %v568
    %v570 = vpop.xlane.xlu0 %569
    %v571 = vmax.f32 %v570, 1e-24
    %v572 = vrsqrt.pop %v571
    %v573 = vld [vmem:[#allocation8] sm:$0xff]
    %v574 = vld [vmem:[#allocation8 + $0x8] sm:$0xff]
    %v575 = vld [vmem:[#allocation8 + $0x10] sm:$0xff]
    %v576 = vld [vmem:[#allocation8 + $0x18] sm:$0xff]
    %v577 = vld [vmem:[#allocation8 + $0x20] sm:$0xff]
    %v578 = vld [vmem:[#allocation8 + $0x28] sm:$0xff]
    %v579 = vld [vmem:[#allocation8 + $0x30] sm:$0xff]
    %v580 = vld [vmem:[#allocation8 + $0x38] sm:$0xff]
    %v581 = vld [vmem:[#allocation8 + $0x40] sm:$0xff]
    %v582 = vld [vmem:[#allocation8 + $0x48] sm:$0xff]
    %v583 = vld [vmem:[#allocation8 + $0x50] sm:$0xff]
    %v584 = vld [vmem:[#allocation8 + $0x58] sm:$0xff]
    %v585 = vld [vmem:[#allocation8 + $0x60] sm:$0xff]
    %v586 = vld [vmem:[#allocation8 + $0x68] sm:$0xff]
    %v587 = vld [vmem:[#allocation8 + $0x70] sm:$0xff]
    %v588 = vld [vmem:[#allocation8 + $0x78] sm:$0xff]
    %589 = vmatprep.subr.mxu0 0.0
    %590 = vmatpush1.msra.mxu0 %v588
    %591 = vmatprep.subr.mxu0 0.0
    %592 = vmatpush1.msra.mxu0 %v587
    %593 = vmatprep.subr.mxu0 0.0
    %594 = vmatpush1.msra.mxu0 %v586
    %595 = vmatprep.subr.mxu0 0.0
    %596 = vmatpush1.msra.mxu0 %v585
    %597 = vmatprep.subr.mxu0 0.0
    %598 = vmatpush1.msra.mxu0 %v584
    %599 = vmatprep.subr.mxu0 0.0
    %600 = vmatpush1.msra.mxu0 %v583
    %601 = vmatprep.subr.mxu0 0.0
    %602 = vmatpush1.msra.mxu0 %v582
    %603 = vmatprep.subr.mxu0 0.0
    %604 = vmatpush1.msra.mxu0 %v581
    %605 = vmatprep.subr.mxu0 0.0
    %606 = vmatpush1.msra.mxu0 %v580
    %607 = vmatprep.subr.mxu0 0.0
    %608 = vmatpush1.msra.mxu0 %v579
    %609 = vmatprep.subr.mxu0 0.0
    %610 = vmatpush1.msra.mxu0 %v578
    %611 = vmatprep.subr.mxu0 0.0
    %612 = vmatpush1.msra.mxu0 %v577
    %613 = vmatprep.subr.mxu0 0.0
    %614 = vmatpush1.msra.mxu0 %v576
    %615 = vmatprep.subr.mxu0 0.0
    %616 = vmatpush1.msra.mxu0 %v575
    %617 = vmatprep.subr.mxu0 0.0
    %618 = vmatpush1.msra.mxu0 %v574
    %619 = vmatprep.subr.mxu0 0.0
    %620 = vmatpush1.msra.mxu0 %v573
    %621 = vmatprep.subr.mxu0 0.0
    %622 = vmatpush2.msra.mxu0 0.0
    %623 = vmatprep.subr.mxu0 0.0
    %624 = vmatpush2.msra.mxu0 0.0
    %625 = vmatprep.subr.mxu0 0.0
    %626 = vmatpush2.msra.mxu0 0.0
    %627 = vmatprep.subr.mxu0 0.0
    %628 = vmatpush2.msra.mxu0 0.0
    %629 = vmatprep.subr.mxu0 0.0
    %630 = vmatpush2.msra.mxu0 0.0
    %631 = vmatprep.subr.mxu0 0.0
    %632 = vmatpush2.msra.mxu0 0.0
    %633 = vmatprep.subr.mxu0 0.0
    %634 = vmatpush2.msra.mxu0 0.0
    %635 = vmatprep.subr.mxu0 0.0
    %636 = vmatpush2.msra.mxu0 0.0
    %637 = vmatprep.subr.mxu0 0.0
    %638 = vmatpush2.msra.mxu0 0.0
    %639 = vmatprep.subr.mxu0 0.0
    %640 = vmatpush2.msra.mxu0 0.0
    %641 = vmatprep.subr.mxu0 0.0
    %642 = vmatpush2.msra.mxu0 0.0
    %643 = vmatprep.subr.mxu0 0.0
    %644 = vmatpush2.msra.mxu0 0.0
    %645 = vmatprep.subr.mxu0 0.0
    %646 = vmatpush2.msra.mxu0 0.0
    %647 = vmatprep.subr.mxu0 0.0
    %648 = vmatpush2.msra.mxu0 0.0
    %649 = vmatprep.subr.mxu0 0.0
    %650 = vmatpush2.msra.mxu0 0.0
    %651 = vmatprep.subr.mxu0 0.0
    %652 = vmatpush2.msra.mxu0 0.0
    %653 = vmatprep.mubr.f32.mxu0 0.0
    %654 = vmatmul.mubr.f32.gmra.mxu0 %v567
    %v655 = vpop.f32.mrf.mxu0
    %v656 = vadd.f32 0.0, %v655
    %v657 = vpop.f32.mrf.mxu0
    %658 = vdwg.mxu0
    %v659 = vmul.f32 %v656, %v572
    %660 = vst [vmem:[#allocation10] sm:$0xff] %v659
    // Predicated region
    $region42: #{tpu_custom_call.1} parent=1 // pred_check
      _
    $region43: #{tpu_custom_call.1} parent=1 // pred_check_branch
      %662 = sbr.rel (0) target = $region45
    $region44: #{tpu_custom_call.1} parent=1 // pred_region
      %s664 = ssub.s32 128, 128
      %665 = vsyncadd [#allocation4], %s664
      %s667 = sshll.u32 [#allocation10], 4
      %s668 = int_to_ptr.vmem [resolvable:$true] %s667
      %670 = dma.vmem_to_hbm [thread:$0]  %s668, 128, %s6, [#allocation4]
    $region45: #{tpu_custom_call.1} parent=1 // pred_fallthru
      _
    // Predicated region
    $region46: #{tpu_custom_call.1} parent=1 // pred_check
      _
    $region47: #{tpu_custom_call.1} parent=1 // pred_check_branch
      %672 = sbr.rel (0) target = $region49
    $region48: #{tpu_custom_call.1} parent=1 // pred_region
      %673 = dma.done [#allocation4], 128
    $region49: #{tpu_custom_call.1} parent=1 // pred_fallthru
      _
    %674 = vsyncpa [#allocation3], 1
    %675 = vsyncpa [#allocation6], 1
    %676 = vsyncpa [#allocation9], 1
    %677 = vsyncpa [#allocation4], 1

</llo_original>
